<compile_context>
chip_gen: v5e
topology: v5e:2x2
jax: 0.10.0
libtpu: 0.0.40
codegen_flags: <defaults>
</compile_context>

<pallas_src>
import math
import functools
import numpy as np

import jax
import jax.numpy as jnp
from jax.experimental import pallas as pl
from jax.experimental.pallas import tpu as pltpu


def self_attention_kernel(xim_ref, wqkv_ref, bqkv_ref, wd_ref, bd_ref, out_ref,
                          *, batch, seq_len, head_size):
    H = head_size
    L = seq_len

    # --- fused causal-conv(Q,K) + value Linear: one (B*L, k*C) @ (k*C, 3H) matmul ---
    qkv = jnp.dot(xim_ref[...], wqkv_ref[...],
                  preferred_element_type=jnp.float32) + bqkv_ref[...]   # (B*L, 3H) f32

    scale = 1.0 / math.sqrt(H)
    q_all = jnp.tanh(qkv[:, :H]) * scale          # fold 1/sqrt(H) into q
    k_all = jnp.tanh(qkv[:, H:2 * H])
    v_all = qkv[:, 2 * H:]

    # --- single-head attention, static unroll over the (tiny) batch ---
    ctx_blocks = []
    for b in range(batch):                        # B=2: static Python unroll
        rows = slice(b * L, (b + 1) * L)
        q = q_all[rows].astype(jnp.bfloat16)
        kk = k_all[rows].astype(jnp.bfloat16)
        v = v_all[rows].astype(jnp.bfloat16)

        scores = jnp.dot(q, kk.T, preferred_element_type=jnp.float32)  # (L, L) f32
        m = jnp.max(scores, axis=-1, keepdims=True)
        e = jnp.exp(scores - m)
        probs = e * pl.reciprocal(jnp.sum(e, axis=-1, keepdims=True), approx=True)
        # TODO(synk): attn_dropout / out_dropout are identity in inference mode;
        #             self.LayerNorm is constructed but never applied in forward().
        ctx_blocks.append(jnp.dot(probs.astype(jnp.bfloat16), v,
                                  preferred_element_type=jnp.float32))  # (L, H)
    ctx = jnp.concatenate(ctx_blocks, axis=0)     # (B*L, H) f32

    # --- output dense: Linear(hidden -> hidden) ---
    out = jnp.dot(ctx.astype(jnp.bfloat16), wd_ref[...],
                  preferred_element_type=jnp.float32) + bd_ref[...]
    out_ref[...] = out.astype(out_ref.dtype)


def self_attention_forward(x_ncl, params, *, k=5):
    """x_ncl: (B, C=11, L) float32, PyTorch NCL layout.  Returns (B, L, hidden)."""
    B, C, L = x_ncl.shape
    H = params["wv"].shape[1]

    # --- wrapper-side im2col (causal) and Q/K/V weight fusion (pure layout work) ---
    x = jnp.transpose(x_ncl, (0, 2, 1))                              # (B, L, C)
    xpad = jnp.pad(x, ((0, 0), (k - 1, 0), (0, 0)))                  # causal left pad
    # column block j holds xpad[:, t+j, :]; matches w.reshape(k*C, H) row order (j, c)
    xim = jnp.concatenate([xpad[:, j:j + L, :] for j in range(k)], axis=-1)
    xim = xim.reshape(B * L, k * C).astype(jnp.bfloat16)             # (B*L, k*C)

    wq_flat = params["wq"].reshape(k * C, H)
    wk_flat = params["wk"].reshape(k * C, H)
    # value Linear only sees x == im2col columns of tap j = k-1
    wv_flat = jnp.zeros((k * C, H), jnp.float32).at[(k - 1) * C:, :].set(params["wv"])
    w_qkv = jnp.concatenate([wq_flat, wk_flat, wv_flat], axis=1).astype(jnp.bfloat16)
    b_qkv = jnp.concatenate([params["bq"], params["bk"], params["bv"]], axis=1)  # (1,3H)
    wd = params["wd"].astype(jnp.bfloat16)

    kernel = functools.partial(self_attention_kernel,
                               batch=B, seq_len=L, head_size=H)

    def full(shape):
        n = len(shape)
        return pl.BlockSpec(shape, lambda i: (0,) * n)

    out2 = pl.pallas_call(
        kernel,
        out_shape=jax.ShapeDtypeStruct((B * L, H), jnp.float32),
        grid_spec=pltpu.PrefetchScalarGridSpec(
            num_scalar_prefetch=0,
            grid=(1,),                              # whole problem in one invocation
            in_specs=[
                full((B * L, k * C)),   # xim   (bf16)
                full((k * C, 3 * H)),   # w_qkv (bf16)
                full((1, 3 * H)),       # b_qkv (f32)
                full((H, H)),           # wd    (bf16)
                full((1, H)),           # bd    (f32)
            ],
            out_specs=full((B * L, H)),
        ),
        compiler_params=pltpu.CompilerParams(dimension_semantics=("arbitrary",)),
    )(xim, w_qkv, b_qkv, wd, params["bd"])
    return out2.reshape(B, L, H)


def reference_forward(x_ncl, params, *, k=5):
    """Pure-JAX f32 reference mirroring the PyTorch forward (1 head, eval mode)."""
    x = jnp.transpose(x_ncl, (0, 2, 1))                      # (B, L, C)
    xpad = jnp.pad(x, ((0, 0), (k - 1, 0), (0, 0)))
    L = x.shape[1]
    H = params["wv"].shape[1]

    def conv(w, b):
        acc = sum(jnp.einsum("blc,ch->blh", xpad[:, j:j + L, :], w[j]) for j in range(k))
        return jnp.tanh(acc + b)

    q = conv(params["wq"], params["bq"])
    kk = conv(params["wk"], params["bk"])
    v = jnp.einsum("blc,ch->blh", x, params["wv"]) + params["bv"]
    scores = jnp.einsum("bqh,bkh->bqk", q, kk) / math.sqrt(H)
    probs = jax.nn.softmax(scores, axis=-1)
    ctx = jnp.einsum("bqk,bkh->bqh", probs, v)
    return jnp.einsum("blh,ho->blo", ctx, params["wd"]) + params["bd"]


def init_params(key, *, in_channels=11, hidden=32, k=5):
    """Deterministic synthetic params (PyTorch tensor layouts -> kernel layouts)."""
    keys = jax.random.split(key, 8)
    # PyTorch layouts: Conv1d weight (H, C, k); Linear weight (out, in).
    conv_q_w = jax.random.normal(keys[0], (hidden, in_channels, k), jnp.float32) * 0.1
    conv_q_b = jax.random.normal(keys[1], (hidden,), jnp.float32) * 0.1
    conv_k_w = jax.random.normal(keys[2], (hidden, in_channels, k), jnp.float32) * 0.1
    conv_k_b = jax.random.normal(keys[3], (hidden,), jnp.float32) * 0.1
    val_w = jax.random.normal(keys[4], (hidden, in_channels), jnp.float32) * 0.1
    val_b = jax.random.normal(keys[5], (hidden,), jnp.float32) * 0.1
    dense_w = jax.random.normal(keys[6], (hidden, hidden), jnp.float32) * 0.1
    dense_b = jax.random.normal(keys[7], (hidden,), jnp.float32) * 0.1
    return {
        # conv weight (H, C, k) -> (k, C, H) so y[t, h] = sum_j xpad[t+j, :] @ w[j]
        "wq": jnp.transpose(conv_q_w, (2, 1, 0)), "bq": conv_q_b.reshape(1, hidden),
        "wk": jnp.transpose(conv_k_w, (2, 1, 0)), "bk": conv_k_b.reshape(1, hidden),
        "wv": val_w.T, "bv": val_b.reshape(1, hidden),
        "wd": dense_w.T, "bd": dense_b.reshape(1, hidden),
    }


if __name__ == "__main__":
    # Module config: num_attention_heads=1, input channels=11 (fixed by the module),
    # hidden_size=32, seq_len=16, batch=2.
    B, C, L, HIDDEN, K = 2, 11, 16, 32, 5

    key = jax.random.PRNGKey(0)
    kx, kp = jax.random.split(key)
    x = jax.random.normal(kx, (B, C, L), jnp.float32)   # PyTorch NCL input
    params = init_params(kp, in_channels=C, hidden=HIDDEN, k=K)

    out = self_attention_forward(x, params, k=K)
    out = jax.block_until_ready(out)

    ref = reference_forward(x, params, k=K)
    np.testing.assert_allclose(np.asarray(out), np.asarray(ref), rtol=2e-2, atol=2e-2)

    print("KERNEL_OK")
</pallas_src>

<mosaic_0001>
module attributes {stable_mosaic.version = 11 : i64} {
  func.func @self_attention_kernel(%arg0: i32, %arg1: memref<32x55xbf16, #tpu.memory_space<vmem>>, %arg2: memref<55x96xbf16, #tpu.memory_space<vmem>>, %arg3: memref<1x96xf32, #tpu.memory_space<vmem>>, %arg4: memref<32x32xbf16, #tpu.memory_space<vmem>>, %arg5: memref<1x32xf32, #tpu.memory_space<vmem>>, %arg6: memref<32x32xf32, #tpu.memory_space<vmem>>) attributes {dimension_semantics = [#tpu.dimension_semantics<arbitrary>], iteration_bounds = array<i64: 1>, scalar_prefetch = 0 : i64, scratch_operands = 0 : i64, tpu.core_type = #tpu.core_type<tc>, window_params = [{pipeline_mode = #tpu.pipeline_mode<synchronous>, transform_indices = @transform_0, window_bounds = array<i64: 32, 55>}, {pipeline_mode = #tpu.pipeline_mode<synchronous>, transform_indices = @transform_1, window_bounds = array<i64: 55, 96>}, {pipeline_mode = #tpu.pipeline_mode<synchronous>, transform_indices = @transform_2, window_bounds = array<i64: 1, 96>}, {pipeline_mode = #tpu.pipeline_mode<synchronous>, transform_indices = @transform_3, window_bounds = array<i64: 32, 32>}, {pipeline_mode = #tpu.pipeline_mode<synchronous>, transform_indices = @transform_4, window_bounds = array<i64: 1, 32>}, {pipeline_mode = #tpu.pipeline_mode<synchronous>, transform_indices = @transform_5, window_bounds = array<i64: 32, 32>}]} {
    %c0 = arith.constant 0 : index
    %c0_0 = arith.constant 0 : index
    %0 = vector.load %arg1[%c0, %c0_0] : memref<32x55xbf16, #tpu.memory_space<vmem>>, vector<32x55xbf16>
    %c0_1 = arith.constant 0 : index
    %c0_2 = arith.constant 0 : index
    %1 = vector.load %arg2[%c0_1, %c0_2] : memref<55x96xbf16, #tpu.memory_space<vmem>>, vector<55x96xbf16>
    %cst = arith.constant dense<0.000000e+00> : vector<32x96xf32>
    %2 = tpu.matmul %0, %1, %cst {dimension_numbers = #tpu.dot_dimension_numbers<[1], [0], [0], [1], [0, 0, 1, 1], [], []>} : vector<32x55xbf16>, vector<55x96xbf16>, vector<32x96xf32> -> vector<32x96xf32>
    %c0_3 = arith.constant 0 : index
    %c0_4 = arith.constant 0 : index
    %3 = vector.load %arg3[%c0_3, %c0_4] : memref<1x96xf32, #tpu.memory_space<vmem>>, vector<1x96xf32>
    %4 = vector.broadcast %3 : vector<1x96xf32> to vector<32x96xf32>
    %5 = arith.addf %2, %4 : vector<32x96xf32>
    %6 = vector.extract_strided_slice %5 {offsets = [0, 0], sizes = [32, 32], strides = [1, 1]} : vector<32x96xf32> to vector<32x32xf32>
    %7 = math.tanh %6 : vector<32x32xf32>
    %cst_5 = arith.constant 0.176776692 : f32
    %8 = vector.broadcast %cst_5 : f32 to vector<32x32xf32>
    %9 = arith.mulf %7, %8 : vector<32x32xf32>
    %10 = vector.extract_strided_slice %5 {offsets = [0, 32], sizes = [32, 32], strides = [1, 1]} : vector<32x96xf32> to vector<32x32xf32>
    %11 = math.tanh %10 : vector<32x32xf32>
    %12 = vector.extract_strided_slice %5 {offsets = [0, 64], sizes = [32, 32], strides = [1, 1]} : vector<32x96xf32> to vector<32x32xf32>
    %13 = vector.extract_strided_slice %9 {offsets = [0, 0], sizes = [16, 32], strides = [1, 1]} : vector<32x32xf32> to vector<16x32xf32>
    %14 = arith.truncf %13 : vector<16x32xf32> to vector<16x32xbf16>
    %15 = vector.extract_strided_slice %11 {offsets = [0, 0], sizes = [16, 32], strides = [1, 1]} : vector<32x32xf32> to vector<16x32xf32>
    %16 = arith.truncf %15 : vector<16x32xf32> to vector<16x32xbf16>
    %17 = vector.extract_strided_slice %12 {offsets = [0, 0], sizes = [16, 32], strides = [1, 1]} : vector<32x32xf32> to vector<16x32xf32>
    %18 = arith.truncf %17 : vector<16x32xf32> to vector<16x32xbf16>
    %19 = tpu.transpose %16, [1, 0] : vector<16x32xbf16> -> vector<32x16xbf16>
    %cst_6 = arith.constant dense<0.000000e+00> : vector<16x16xf32>
    %20 = tpu.matmul %14, %19, %cst_6 {dimension_numbers = #tpu.dot_dimension_numbers<[1], [0], [0], [1], [0, 0, 1, 1], [], []>} : vector<16x32xbf16>, vector<32x16xbf16>, vector<16x16xf32> -> vector<16x16xf32>
    %cst_7 = arith.constant dense<0xFF800000> : vector<16xf32>
    %21 = vector.multi_reduction <maximumf>, %20, %cst_7 [1] : vector<16x16xf32> to vector<16xf32>
    %22 = vector.shape_cast %21 : vector<16xf32> to vector<16x1xf32>
    %23 = vector.broadcast %22 : vector<16x1xf32> to vector<16x16xf32>
    %24 = arith.subf %20, %23 : vector<16x16xf32>
    %25 = math.exp %24 : vector<16x16xf32>
    %cst_8 = arith.constant dense<0.000000e+00> : vector<16xf32>
    %26 = vector.multi_reduction <add>, %25, %cst_8 [1] : vector<16x16xf32> to vector<16xf32>
    %27 = vector.shape_cast %26 : vector<16xf32> to vector<16x1xf32>
    %28 = tpu.reciprocal %27 {approx = true} : vector<16x1xf32> -> vector<16x1xf32>
    %29 = vector.broadcast %28 : vector<16x1xf32> to vector<16x16xf32>
    %30 = arith.mulf %25, %29 : vector<16x16xf32>
    %31 = arith.truncf %30 : vector<16x16xf32> to vector<16x16xbf16>
    %cst_9 = arith.constant dense<0.000000e+00> : vector<16x32xf32>
    %32 = tpu.matmul %31, %18, %cst_9 {dimension_numbers = #tpu.dot_dimension_numbers<[1], [0], [0], [1], [0, 0, 1, 1], [], []>} : vector<16x16xbf16>, vector<16x32xbf16>, vector<16x32xf32> -> vector<16x32xf32>
    %33 = vector.extract_strided_slice %9 {offsets = [16, 0], sizes = [16, 32], strides = [1, 1]} : vector<32x32xf32> to vector<16x32xf32>
    %34 = arith.truncf %33 : vector<16x32xf32> to vector<16x32xbf16>
    %35 = vector.extract_strided_slice %11 {offsets = [16, 0], sizes = [16, 32], strides = [1, 1]} : vector<32x32xf32> to vector<16x32xf32>
    %36 = arith.truncf %35 : vector<16x32xf32> to vector<16x32xbf16>
    %37 = vector.extract_strided_slice %12 {offsets = [16, 0], sizes = [16, 32], strides = [1, 1]} : vector<32x32xf32> to vector<16x32xf32>
    %38 = arith.truncf %37 : vector<16x32xf32> to vector<16x32xbf16>
    %39 = tpu.transpose %36, [1, 0] : vector<16x32xbf16> -> vector<32x16xbf16>
    %cst_10 = arith.constant dense<0.000000e+00> : vector<16x16xf32>
    %40 = tpu.matmul %34, %39, %cst_10 {dimension_numbers = #tpu.dot_dimension_numbers<[1], [0], [0], [1], [0, 0, 1, 1], [], []>} : vector<16x32xbf16>, vector<32x16xbf16>, vector<16x16xf32> -> vector<16x16xf32>
    %cst_11 = arith.constant dense<0xFF800000> : vector<16xf32>
    %41 = vector.multi_reduction <maximumf>, %40, %cst_11 [1] : vector<16x16xf32> to vector<16xf32>
    %42 = vector.shape_cast %41 : vector<16xf32> to vector<16x1xf32>
    %43 = vector.broadcast %42 : vector<16x1xf32> to vector<16x16xf32>
    %44 = arith.subf %40, %43 : vector<16x16xf32>
    %45 = math.exp %44 : vector<16x16xf32>
    %cst_12 = arith.constant dense<0.000000e+00> : vector<16xf32>
    %46 = vector.multi_reduction <add>, %45, %cst_12 [1] : vector<16x16xf32> to vector<16xf32>
    %47 = vector.shape_cast %46 : vector<16xf32> to vector<16x1xf32>
    %48 = tpu.reciprocal %47 {approx = true} : vector<16x1xf32> -> vector<16x1xf32>
    %49 = vector.broadcast %48 : vector<16x1xf32> to vector<16x16xf32>
    %50 = arith.mulf %45, %49 : vector<16x16xf32>
    %51 = arith.truncf %50 : vector<16x16xf32> to vector<16x16xbf16>
    %cst_13 = arith.constant dense<0.000000e+00> : vector<16x32xf32>
    %52 = tpu.matmul %51, %38, %cst_13 {dimension_numbers = #tpu.dot_dimension_numbers<[1], [0], [0], [1], [0, 0, 1, 1], [], []>} : vector<16x16xbf16>, vector<16x32xbf16>, vector<16x32xf32> -> vector<16x32xf32>
    %53 = tpu.concatenate %32, %52 in 0 : vector<16x32xf32>, vector<16x32xf32> -> vector<32x32xf32>
    %54 = arith.truncf %53 : vector<32x32xf32> to vector<32x32xbf16>
    %c0_14 = arith.constant 0 : index
    %c0_15 = arith.constant 0 : index
    %55 = vector.load %arg4[%c0_14, %c0_15] : memref<32x32xbf16, #tpu.memory_space<vmem>>, vector<32x32xbf16>
    %cst_16 = arith.constant dense<0.000000e+00> : vector<32x32xf32>
    %56 = tpu.matmul %54, %55, %cst_16 {dimension_numbers = #tpu.dot_dimension_numbers<[1], [0], [0], [1], [0, 0, 1, 1], [], []>} : vector<32x32xbf16>, vector<32x32xbf16>, vector<32x32xf32> -> vector<32x32xf32>
    %c0_17 = arith.constant 0 : index
    %c0_18 = arith.constant 0 : index
    %57 = vector.load %arg5[%c0_17, %c0_18] : memref<1x32xf32, #tpu.memory_space<vmem>>, vector<1x32xf32>
    %58 = vector.broadcast %57 : vector<1x32xf32> to vector<32x32xf32>
    %59 = arith.addf %56, %58 : vector<32x32xf32>
    %c0_19 = arith.constant 0 : index
    %c0_20 = arith.constant 0 : index
    %60 = vector.load %arg6[%c0_19, %c0_20] : memref<32x32xf32, #tpu.memory_space<vmem>>, vector<32x32xf32>
    tpu.vector_store %arg6[%c0_19, %c0_20], %59 {strides = array<i32>} : memref<32x32xf32, #tpu.memory_space<vmem>>, vector<32x32xf32>,
    return
  }
  func.func @transform_0(%arg0: i32) -> (i32, i32) {
    %c0_i32 = arith.constant 0 : i32
    %c0_i32_0 = arith.constant 0 : i32
    %c0_i32_1 = arith.constant 0 : i32
    return %c0_i32, %c0_i32_0 : i32, i32
  }
  func.func @transform_1(%arg0: i32) -> (i32, i32) {
    %c0_i32 = arith.constant 0 : i32
    %c0_i32_0 = arith.constant 0 : i32
    %c0_i32_1 = arith.constant 0 : i32
    return %c0_i32, %c0_i32_0 : i32, i32
  }
  func.func @transform_2(%arg0: i32) -> (i32, i32) {
    %c0_i32 = arith.constant 0 : i32
    %c0_i32_0 = arith.constant 0 : i32
    %c0_i32_1 = arith.constant 0 : i32
    return %c0_i32, %c0_i32_0 : i32, i32
  }
  func.func @transform_3(%arg0: i32) -> (i32, i32) {
    %c0_i32 = arith.constant 0 : i32
    %c0_i32_0 = arith.constant 0 : i32
    %c0_i32_1 = arith.constant 0 : i32
    return %c0_i32, %c0_i32_0 : i32, i32
  }
  func.func @transform_4(%arg0: i32) -> (i32, i32) {
    %c0_i32 = arith.constant 0 : i32
    %c0_i32_0 = arith.constant 0 : i32
    %c0_i32_1 = arith.constant 0 : i32
    return %c0_i32, %c0_i32_0 : i32, i32
  }
  func.func @transform_5(%arg0: i32) -> (i32, i32) {
    %c0_i32 = arith.constant 0 : i32
    %c0_i32_0 = arith.constant 0 : i32
    %c0_i32_1 = arith.constant 0 : i32
    return %c0_i32, %c0_i32_0 : i32, i32
  }
}

</mosaic_0001>

<llo_original>
// kernel: tpu_custom_call.1
$region0: #{tpu_custom_call.1}
  #allocation0 [shape = 'u32[]', space=smem, size = 0x4, offset = 0x4, fixed_abs, tag = 'smem constant byte address 0x4 - core index']
  #allocation1 [shape = 'u32[72,128]{1,0:T(1,128)}', space=vmem, size = 0x9000, scoped, tag = 'internal scratch']
  %s0 = inlined_call_operand.hbm [shape: bf16[32,55], index: 0, kind: input, shape index: {}]
  %s1 = inlined_call_operand.hbm [shape: bf16[55,96], index: 1, kind: input, shape index: {}]
  %s2 = inlined_call_operand.vmem [shape: f32[1,96], index: 2, kind: input, shape index: {}]
  %s3 = inlined_call_operand.hbm [shape: bf16[32,32], index: 3, kind: input, shape index: {}]
  %s4 = inlined_call_operand.vmem [shape: f32[1,32], index: 4, kind: input, shape index: {}]
  %s5 = inlined_call_operand.hbm [shape: f32[32,32], index: 5, kind: output, shape index: {}]
  %s6 = sld [smem:[#allocation0]]
  $region42: #{tpu_custom_call.1} parent=0
    _
  %s8 = ssub.s32 1, %s6
  %s9 = scalar_select 0, %s8, %s6
  $region1: #{tpu_custom_call.1} parent=0
    #allocation2 [shape = 'u8[8192]{0}', space=vmem, size = 0x2000, scoped, tag = 'input window, operand 0, single buffered']
    #allocation3 [shape = 's32[1]{0}', space=sflag, size = 0x4, scoped, tag = 'scoped memory for tpu_custom_call.1']
    #allocation4 [shape = 's32[1]{0}', space=sflag, size = 0x4, scoped, tag = 'scoped memory for tpu_custom_call.1']
    #allocation5 [shape = 'u8[14336]{0}', space=vmem, size = 0x3800, scoped, tag = 'input window, operand 1, single buffered']
    #allocation6 [shape = 's32[1]{0}', space=sflag, size = 0x4, scoped, tag = 'scoped memory for tpu_custom_call.1']
    #allocation7 [shape = 'u8[8192]{0}', space=vmem, size = 0x2000, scoped, tag = 'input window, operand 3, single buffered']
    #allocation8 [shape = 'u8[16384]{0}', space=vmem, size = 0x4000, scoped, tag = 'output window, operand 0, single buffered']
    %10 = vsyncpa [#allocation3], 0
    %11 = vsyncpa [#allocation6], 0
    %12 = vsyncpa [#allocation4], 0
    // Predicated region
    $region2: #{tpu_custom_call.1} parent=1 // pred_check
      _
    $region3: #{tpu_custom_call.1} parent=1 // pred_check_branch
      %14 = sbr.rel (0) target = $region5
    $region4: #{tpu_custom_call.1} parent=1 // pred_region
      %16 = vsyncadd [#allocation3], 0
      %s17 = sshll.u32 %s0, 4
      %s18 = int_to_ptr.hbm [resolvable:$true] %s17
      %s19 = sshll.u32 [#allocation2], 4
      %s20 = int_to_ptr.vmem [resolvable:$true] %s19
      %25 = dma.hbm_to_vmem [thread:$0]  %s18, 256, %s20, [#allocation3], 64, 64, 4
    $region5: #{tpu_custom_call.1} parent=1 // pred_fallthru
      _
    // Predicated region
    $region6: #{tpu_custom_call.1} parent=1 // pred_check
      _
    $region7: #{tpu_custom_call.1} parent=1 // pred_check_branch
      %27 = sbr.rel (0) target = $region9
    $region8: #{tpu_custom_call.1} parent=1 // pred_region
      %29 = vsyncadd [#allocation6], 0
      %s30 = sshll.u32 %s1, 4
      %s31 = int_to_ptr.hbm [resolvable:$true] %s30
      %s32 = sshll.u32 [#allocation5], 4
      %s33 = int_to_ptr.vmem [resolvable:$true] %s32
      %38 = dma.hbm_to_vmem [thread:$0]  %s31, 448, %s33, [#allocation6], 64, 64, 4
    $region9: #{tpu_custom_call.1} parent=1 // pred_fallthru
      _
    // Predicated region
    $region10: #{tpu_custom_call.1} parent=1 // pred_check
      _
    $region11: #{tpu_custom_call.1} parent=1 // pred_check_branch
      %40 = sbr.rel (0) target = $region13
    $region12: #{tpu_custom_call.1} parent=1 // pred_region
      _
    $region13: #{tpu_custom_call.1} parent=1 // pred_fallthru
      _
    // Predicated region
    $region14: #{tpu_custom_call.1} parent=1 // pred_check
      _
    $region15: #{tpu_custom_call.1} parent=1 // pred_check_branch
      %42 = sbr.rel (0) target = $region17
    $region16: #{tpu_custom_call.1} parent=1 // pred_region
      %44 = vsyncadd [#allocation6], 0
      %s45 = sshll.u32 %s3, 4
      %s46 = int_to_ptr.hbm [resolvable:$true] %s45
      %s47 = sshll.u32 [#allocation7], 4
      %s48 = int_to_ptr.vmem [resolvable:$true] %s47
      %53 = dma.hbm_to_vmem [thread:$0]  %s46, 256, %s48, [#allocation6], 64, 64, 4
    $region17: #{tpu_custom_call.1} parent=1 // pred_fallthru
      _
    // Predicated region
    $region18: #{tpu_custom_call.1} parent=1 // pred_check
      _
    $region19: #{tpu_custom_call.1} parent=1 // pred_check_branch
      %55 = sbr.rel (0) target = $region21
    $region20: #{tpu_custom_call.1} parent=1 // pred_region
      _
    $region21: #{tpu_custom_call.1} parent=1 // pred_fallthru
      _
    // Predicated region
    $region22: #{tpu_custom_call.1} parent=1 // pred_check
      _
    $region23: #{tpu_custom_call.1} parent=1 // pred_check_branch
      %57 = sbr.rel (0) target = $region25
    $region24: #{tpu_custom_call.1} parent=1 // pred_region
      %59 = dma.done [#allocation3], 256
    $region25: #{tpu_custom_call.1} parent=1 // pred_fallthru
      _
    // Predicated region
    $region26: #{tpu_custom_call.1} parent=1 // pred_check
      _
    $region27: #{tpu_custom_call.1} parent=1 // pred_check_branch
      %61 = sbr.rel (0) target = $region29
    $region28: #{tpu_custom_call.1} parent=1 // pred_region
      %63 = dma.done [#allocation6], 448
    $region29: #{tpu_custom_call.1} parent=1 // pred_fallthru
      _
    // Predicated region
    $region30: #{tpu_custom_call.1} parent=1 // pred_check
      _
    $region31: #{tpu_custom_call.1} parent=1 // pred_check_branch
      %65 = sbr.rel (0) target = $region33
    $region32: #{tpu_custom_call.1} parent=1 // pred_region
      %67 = dma.done [#allocation6], 256
    $region33: #{tpu_custom_call.1} parent=1 // pred_fallthru
      _
    %v69 = vld [vmem:[#allocation2] sm:$0xf]
    %v70 = vld [vmem:[#allocation2 + $0x4] sm:$0xf]
    %v71 = vld [vmem:[#allocation2 + $0x8] sm:$0xf]
    %v72 = vld [vmem:[#allocation2 + $0xc] sm:$0xf]
    %v73 = vld [vmem:[#allocation5] sm:$0xf]
    %v74 = vld [vmem:[#allocation5 + $0x4] sm:$0xf]
    %v75 = vld [vmem:[#allocation5 + $0x8] sm:$0xf]
    %v76 = vld [vmem:[#allocation5 + $0xc] sm:$0xf]
    %v77 = vld [vmem:[#allocation5 + $0x10] sm:$0xf]
    %v78 = vld [vmem:[#allocation5 + $0x14] sm:$0xf]
    %v79 = vld [vmem:[#allocation5 + $0x18] sm:$0xf]
    %v80 = vld [vmem:[%s2] sm:$0x1]
    %v82 = vperm.slane %v80, 0
    %v88 = vunpack.c.l.b16 %v69
    %v89 = vunpack.c.l.b16 %v70
    %v90 = vunpack.c.l.b16 %v71
    %v91 = vunpack.c.l.b16 %v72
    %v92 = vpack.c.b16 %v89, %v88
    %v93 = vpack.c.b16 %v91, %v90
    %v101 = vunpack.c.l.b16 %v73
    %v102 = vunpack.c.l.b16 %v74
    %v103 = vunpack.c.l.b16 %v75
    %v104 = vunpack.c.l.b16 %v76
    %v105 = vunpack.c.l.b16 %v77
    %v106 = vunpack.c.l.b16 %v78
    %v107 = vunpack.c.l.b16 %v79
    %v108 = vpack.c.b16 %v102, %v101
    %v109 = vpack.c.b16 %v104, %v103
    %v110 = vpack.c.b16 %v106, %v105
    %v111 = vpack.c.b16 %v107, %v107
    %vm115 = vcmask 449536
    %v117 = vsel %vm115, %v92, 0
    %v120 = vsel %vm115, %v93, 0
    %vm122 = vcmask 1042432
    %vm123 = vcmask 1043456
    %v124 = vsel %vm122, 4294967295, 65535
    %v125 = vsel %vm123, %v124, 0
    %v127 = vand.u32 %v111, %v125
    %129 = vmatpush.bf16.msra.mxu0 0
    %130 = vmatpush.bf16.msra.mxu0 0
    %131 = vmatpush.bf16.msra.mxu0 0
    %132 = vmatpush.bf16.msra.mxu0 0
    %133 = vmatpush.bf16.msra.mxu0 %v127
    %134 = vmatpush.bf16.msra.mxu0 %v110
    %135 = vmatpush.bf16.msra.mxu0 %v109
    %136 = vmatpush.bf16.msra.mxu0 %v108
    %137 = vmatmul.bf16.gmra.mxu0 %v117
    %v138 = vpop.f32.mrf.mxu0
    %v139 = vadd.f32 %v82, %v138
    %v140 = vpop.f32.mrf.mxu0
    %v141 = vadd.f32 %v82, %v140
    %142 = vmatmul.bf16.gmra.mxu0 %v120
    %v143 = vpop.f32.mrf.mxu0
    %v144 = vadd.f32 %v82, %v143
    %v145 = vpop.f32.mrf.mxu0
    %v146 = vadd.f32 %v82, %v145
    %147 = vdwg.mxu0
    %v148 = vtanh.pop %v139
    %v149 = vtanh.pop %v141
    %v150 = vtanh.pop %v144
    %v151 = vtanh.pop %v146
    %v152 = vmul.f32 %v148, 0.17677669
    %v153 = vmul.f32 %v149, 0.17677669
    %v154 = vmul.f32 %v150, 0.17677669
    %v155 = vmul.f32 %v151, 0.17677669
    %v156 = vpack.c.bf16 %v153, %v152
    %v157 = vpack.c.bf16 %v149, %v148
    %v158 = vpack.c.bf16 %v141, %v139
    %160 = vrot.lane.b32.xlu0 %v157, 96
    %v161 = vpop.permute.xlu0 %160
    %vm162 = vcmask 261120
    %v164 = vsel %vm162, %v156, 0
    %v167 = vsel %vm162, %v161, 0
    %169 = vmatpush.bf16.xpose.msra.mxu0 0
    %170 = vmatpush.bf16.xpose.msra.mxu0 0
    %171 = vmatpush.bf16.xpose.msra.mxu0 0
    %172 = vmatpush.bf16.xpose.msra.mxu0 0
    %173 = vmatpush.bf16.xpose.msra.mxu0 0
    %174 = vmatpush.bf16.xpose.msra.mxu0 0
    %175 = vmatpush.bf16.xpose.msra.mxu0 0
    %176 = vmatpush.bf16.xpose.msra.mxu0 %v167
    %177 = vmatmul.bf16.gmra.mxu0 %v164
    %v178 = vpop.f32.mrf.mxu0
    %v179 = vadd.f32 0.0, %v178
    %v180 = vpop.f32.mrf.mxu0
    %v181 = vadd.f32 0.0, %v180
    %182 = vdwg.mxu0
    %vm183 = vcmask 130048
    %v184 = vsel %vm183, %v179, -inf
    %185 = vmax.xlane.f32.xlu0 %v184
    %v186 = vpop.xlane.xlu0 %185
    %v187 = vsel %vm183, %v181, -inf
    %188 = vmax.xlane.f32.xlu0 %v187
    %v189 = vpop.xlane.xlu0 %188
    %v190 = vsub.f32 %v179, %v186
    %v191 = vsub.f32 %v181, %v189
    %v192 = vmul.f32 %v190, 1.442695
    %v193 = vpow.pop %v192
    %v194 = vmul.f32 %v191, 1.442695
    %v195 = vpow.pop %v194
    %v196 = vsel %vm183, %v193, 0.0
    %197 = vadd.xlane.f32.xlu0 %v196
    %v198 = vpop.xlane.xlu0 %197
    %v199 = vsel %vm183, %v195, 0.0
    %200 = vadd.xlane.f32.xlu0 %v199
    %v201 = vpop.xlane.xlu0 %200
    %v202 = vrcp.pop %v198
    %v203 = vrcp.pop %v201
    %v204 = vmul.f32 %v193, %v202
    %v205 = vmul.f32 %v195, %v203
    %v206 = vpack.c.bf16 %v205, %v204
    %208 = vrot.lane.b32.xlu0 %v158, 64
    %v209 = vpop.permute.xlu0 %208
    %v212 = vsel %vm183, %v206, 0
    %214 = vmatpush.bf16.msra.mxu0 0
    %215 = vmatpush.bf16.msra.mxu0 0
    %216 = vmatpush.bf16.msra.mxu0 0
    %217 = vmatpush.bf16.msra.mxu0 0
    %218 = vmatpush.bf16.msra.mxu0 0
    %219 = vmatpush.bf16.msra.mxu0 0
    %220 = vmatpush.bf16.msra.mxu0 0
    %221 = vmatpush.bf16.msra.mxu0 %v209
    %222 = vmatmul.bf16.gmra.mxu0 %v212
    %v223 = vpop.f32.mrf.mxu0
    %v224 = vadd.f32 0.0, %v223
    %v225 = vpop.f32.mrf.mxu0
    %v226 = vadd.f32 0.0, %v225
    %227 = vdwg.mxu0
    %v228 = vpack.c.bf16 %v155, %v154
    %v229 = vpack.c.bf16 %v151, %v150
    %v230 = vpack.c.bf16 %v146, %v144
    %232 = vrot.lane.b32.xlu0 %v229, 96
    %v233 = vpop.permute.xlu0 %232
    %v235 = vsel %vm162, %v228, 0
    %v238 = vsel %vm162, %v233, 0
    %240 = vmatpush.bf16.xpose.msra.mxu0 0
    %241 = vmatpush.bf16.xpose.msra.mxu0 0
    %242 = vmatpush.bf16.xpose.msra.mxu0 0
    %243 = vmatpush.bf16.xpose.msra.mxu0 0
    %244 = vmatpush.bf16.xpose.msra.mxu0 0
    %245 = vmatpush.bf16.xpose.msra.mxu0 0
    %246 = vmatpush.bf16.xpose.msra.mxu0 0
    %247 = vmatpush.bf16.xpose.msra.mxu0 %v238
    %248 = vmatmul.bf16.gmra.mxu0 %v235
    %v249 = vpop.f32.mrf.mxu0
    %v250 = vadd.f32 0.0, %v249
    %v251 = vpop.f32.mrf.mxu0
    %v252 = vadd.f32 0.0, %v251
    %253 = vdwg.mxu0
    %v254 = vsel %vm183, %v250, -inf
    %255 = vmax.xlane.f32.xlu0 %v254
    %v256 = vpop.xlane.xlu0 %255
    %v257 = vsel %vm183, %v252, -inf
    %258 = vmax.xlane.f32.xlu0 %v257
    %v259 = vpop.xlane.xlu0 %258
    %v260 = vsub.f32 %v250, %v256
    %v261 = vsub.f32 %v252, %v259
    %v262 = vmul.f32 %v260, 1.442695
    %v263 = vpow.pop %v262
    %v264 = vmul.f32 %v261, 1.442695
    %v265 = vpow.pop %v264
    %v266 = vsel %vm183, %v263, 0.0
    %267 = vadd.xlane.f32.xlu0 %v266
    %v268 = vpop.xlane.xlu0 %267
    %v269 = vsel %vm183, %v265, 0.0
    %270 = vadd.xlane.f32.xlu0 %v269
    %v271 = vpop.xlane.xlu0 %270
    %v272 = vrcp.pop %v268
    %v273 = vrcp.pop %v271
    %v274 = vmul.f32 %v263, %v272
    %v275 = vmul.f32 %v265, %v273
    %v276 = vpack.c.bf16 %v275, %v274
    %278 = vrot.lane.b32.xlu0 %v230, 64
    %v279 = vpop.permute.xlu0 %278
    %v282 = vsel %vm183, %v276, 0
    %284 = vmatpush.bf16.msra.mxu0 0
    %285 = vmatpush.bf16.msra.mxu0 0
    %286 = vmatpush.bf16.msra.mxu0 0
    %287 = vmatpush.bf16.msra.mxu0 0
    %288 = vmatpush.bf16.msra.mxu0 0
    %289 = vmatpush.bf16.msra.mxu0 0
    %290 = vmatpush.bf16.msra.mxu0 0
    %291 = vmatpush.bf16.msra.mxu0 %v279
    %292 = vmatmul.bf16.gmra.mxu0 %v282
    %v293 = vpop.f32.mrf.mxu0
    %v294 = vadd.f32 0.0, %v293
    %v295 = vpop.f32.mrf.mxu0
    %v296 = vadd.f32 0.0, %v295
    %297 = vdwg.mxu0
    %v298 = vpack.c.bf16 %v226, %v224
    %v299 = vpack.c.bf16 %v296, %v294
    %v300 = vld [vmem:[#allocation7] sm:$0xf]
    %v301 = vld [vmem:[#allocation7 + $0x4] sm:$0xf]
    %v302 = vld [vmem:[#allocation7 + $0x8] sm:$0xf]
    %v303 = vld [vmem:[#allocation7 + $0xc] sm:$0xf]
    %v304 = vld [vmem:[%s4] sm:$0x1]
    %v306 = vperm.slane %v304, 0
    %v312 = vunpack.c.l.b16 %v300
    %v313 = vunpack.c.l.b16 %v301
    %v314 = vunpack.c.l.b16 %v302
    %v315 = vunpack.c.l.b16 %v303
    %v316 = vpack.c.b16 %v313, %v312
    %v317 = vpack.c.b16 %v315, %v314
    %v321 = vsel %vm162, %v298, 0
    %v324 = vsel %vm162, %v299, 0
    %326 = vmatpush.bf16.msra.mxu0 0
    %327 = vmatpush.bf16.msra.mxu0 0
    %328 = vmatpush.bf16.msra.mxu0 0
    %329 = vmatpush.bf16.msra.mxu0 0
    %330 = vmatpush.bf16.msra.mxu0 0
    %331 = vmatpush.bf16.msra.mxu0 0
    %332 = vmatpush.bf16.msra.mxu0 %v317
    %333 = vmatpush.bf16.msra.mxu0 %v316
    %334 = vmatmul.bf16.gmra.mxu0 %v321
    %v335 = vpop.f32.mrf.mxu0
    %v336 = vadd.f32 %v306, %v335
    %v337 = vpop.f32.mrf.mxu0
    %v338 = vadd.f32 %v306, %v337
    %339 = vmatmul.bf16.gmra.mxu0 %v324
    %v340 = vpop.f32.mrf.mxu0
    %v341 = vadd.f32 %v306, %v340
    %v342 = vpop.f32.mrf.mxu0
    %v343 = vadd.f32 %v306, %v342
    %344 = vdwg.mxu0
    %345 = vst.msk [vmem:[#allocation8] sm:$0xff] %vm162, %v336
    %346 = vst.msk [vmem:[#allocation8 + $0x8] sm:$0xff] %vm162, %v338
    %347 = vst.msk [vmem:[#allocation8 + $0x10] sm:$0xff] %vm162, %v341
    %348 = vst.msk [vmem:[#allocation8 + $0x18] sm:$0xff] %vm162, %v343
    // Predicated region
    $region34: #{tpu_custom_call.1} parent=1 // pred_check
      _
    $region35: #{tpu_custom_call.1} parent=1 // pred_check_branch
      %350 = sbr.rel (0) target = $region37
    $region36: #{tpu_custom_call.1} parent=1 // pred_region
      %352 = vsyncadd [#allocation4], 0
      %s353 = sshll.u32 [#allocation8], 4
      %s354 = int_to_ptr.vmem [resolvable:$true] %s353
      %s355 = sshll.u32 %s5, 4
      %s356 = int_to_ptr.hbm [resolvable:$true] %s355
      %361 = dma.vmem_to_hbm [thread:$0]  %s354, 512, %s356, [#allocation4], 128, 128, 8
    $region37: #{tpu_custom_call.1} parent=1 // pred_fallthru
      _
    // Predicated region
    $region38: #{tpu_custom_call.1} parent=1 // pred_check
      _
    $region39: #{tpu_custom_call.1} parent=1 // pred_check_branch
      %363 = sbr.rel (0) target = $region41
    $region40: #{tpu_custom_call.1} parent=1 // pred_region
      %365 = dma.done [#allocation4], 512
    $region41: #{tpu_custom_call.1} parent=1 // pred_fallthru
      _
    %366 = vsyncpa [#allocation3], 1
    %367 = vsyncpa [#allocation6], 1
    %368 = vsyncpa [#allocation4], 1

</llo_original>
